<compile_context>
chip_gen: v5e
topology: v5e:2x2
jax: 0.10.0
libtpu: 0.0.40
codegen_flags: <defaults>
</compile_context>

<pallas_src>
import jax
import jax.numpy as jnp
from jax.experimental import pallas as pl
from jax.experimental.pallas import tpu as pltpu


# ----------------------------------------------------------------------------
# Model dimensions (synthetic stand-ins for cfg.id_code_dim / len(skeleton)).
# ----------------------------------------------------------------------------
ID_CODE_DIM = 32           # cfg.id_code_dim
HIDDEN = 64                # hidden width of make_linear_layers([id, 64, J*3])
JOINT_NUM = 8              # len(skeleton)
OUT_DIM = JOINT_NUM * 3    # 24

LANES = 128                # TPU lane width
HIDDEN_PAD = 128           # hidden padded to a full vreg lane width
OUT_PAD = 128              # kernel output padded to a full vreg lane width

# Parameter-slab row layout (all section offsets 8-aligned), shape (SLAB_ROWS, 128):
ROW_W1 = 0                         # rows [0, 32)   : W1 (32 x 64, zero-padded to 128 cols)
ROW_B1 = ID_CODE_DIM               # row  32        : b1 (zero-padded to 128)
ROW_W2 = ID_CODE_DIM + 8           # rows [40, 168) : W2 (padded to 128 x 128, zero rows/cols)
ROW_B2 = ROW_W2 + HIDDEN_PAD       # row  168       : b2 (zero-padded to 128)
SLAB_ROWS = ROW_B2 + 8             # 176 rows (multiple of 8)

B_TILE = 256               # batch tile when gridding over the batch axis


def _skeleton_refine_kernel(x_ref, p_ref, o_ref):
    # x_ref: (Bt, ID_CODE_DIM), p_ref: (SLAB_ROWS, 128), o_ref: (Bt, OUT_PAD)
    x = x_ref[...]
    w1 = p_ref[ROW_W1:ROW_W1 + ID_CODE_DIM, :]    # (32, 128)
    b1 = p_ref[ROW_B1:ROW_B1 + 1, :]              # (1, 128)
    w2 = p_ref[ROW_W2:ROW_W2 + HIDDEN_PAD, :]     # (128, 128)
    b2 = p_ref[ROW_B2:ROW_B2 + 1, :]              # (1, 128)

    h = jnp.dot(x, w1, preferred_element_type=jnp.float32) + b1
    h = jnp.maximum(h, 0.0)        # ReLU after layer 1 only; padded lanes stay 0
    y = jnp.dot(h, w2, preferred_element_type=jnp.float32) + b2
    o_ref[...] = y.astype(o_ref.dtype)


def pack_params(w1, b1, w2, b2):
    """Pack (w1, b1, w2, b2) into one lane-dense (SLAB_ROWS, 128) f32 slab.

    w1: (ID_CODE_DIM, HIDDEN), b1: (HIDDEN,), w2: (HIDDEN, OUT_DIM), b2: (OUT_DIM,)
    (weights stored as (in_features, out_features), i.e. transposed vs PyTorch).
    Pack once and reuse across calls.
    """
    slab = jnp.zeros((SLAB_ROWS, LANES), jnp.float32)
    slab = slab.at[ROW_W1:ROW_W1 + ID_CODE_DIM, :HIDDEN].set(w1.astype(jnp.float32))
    slab = slab.at[ROW_B1, :HIDDEN].set(b1.reshape(-1).astype(jnp.float32))
    slab = slab.at[ROW_W2:ROW_W2 + HIDDEN, :OUT_DIM].set(w2.astype(jnp.float32))
    slab = slab.at[ROW_B2, :OUT_DIM].set(b2.reshape(-1).astype(jnp.float32))
    return slab


def skeleton_refine_net_batched(id_codes, param_slab):
    """id_codes: (B, ID_CODE_DIM) -> (B, JOINT_NUM, 3) float32."""
    B = id_codes.shape[0]
    if B <= B_TILE:
        b_pad = max(8, pl.cdiv(B, 8) * 8)
        num_tiles = 1
    else:
        b_pad = pl.cdiv(B, B_TILE) * B_TILE
        num_tiles = b_pad // B_TILE

    x = jnp.zeros((b_pad, ID_CODE_DIM), jnp.float32)
    x = x.at[:B].set(id_codes.astype(jnp.float32))

    if num_tiles == 1:
        # Small batch: no grid, no software-pipeline machinery; both operands
        # (x and the packed parameter slab) live whole in VMEM.
        out = pl.pallas_call(
            _skeleton_refine_kernel,
            out_shape=jax.ShapeDtypeStruct((b_pad, OUT_PAD), jnp.float32),
            in_specs=[
                pl.BlockSpec(memory_space=pltpu.MemorySpace.VMEM),
                pl.BlockSpec(memory_space=pltpu.MemorySpace.VMEM),
            ],
            out_specs=pl.BlockSpec(memory_space=pltpu.MemorySpace.VMEM),
        )(x, param_slab)
    else:
        # Large batch: 1-D grid over batch tiles; the parameter slab has a
        # constant index_map (stays resident), and "parallel" lets v7x shard
        # batch tiles across its 2 TensorCores (no-op on v5e/v6e).
        out = pl.pallas_call(
            _skeleton_refine_kernel,
            out_shape=jax.ShapeDtypeStruct((b_pad, OUT_PAD), jnp.float32),
            grid=(num_tiles,),
            in_specs=[
                pl.BlockSpec((B_TILE, ID_CODE_DIM), lambda i: (i, 0)),
                pl.BlockSpec((SLAB_ROWS, LANES), lambda i: (0, 0)),
            ],
            out_specs=pl.BlockSpec((B_TILE, OUT_PAD), lambda i: (i, 0)),
            compiler_params=pltpu.CompilerParams(
                dimension_semantics=("parallel",)),
        )(x, param_slab)

    return out[:B, :OUT_DIM].reshape(B, JOINT_NUM, 3)


def skeleton_refine_net(id_code, param_slab):
    """Matches SkeletonRefineNet.forward: single id_code -> (JOINT_NUM, 3)."""
    x = jnp.asarray(id_code, jnp.float32).reshape(1, ID_CODE_DIM)
    return skeleton_refine_net_batched(x, param_slab)[0]


# ----------------------------------------------------------------------------
# Deterministic synthetic parameters + pure-JAX reference.
# ----------------------------------------------------------------------------
def _init_params(key):
    k1, k2, k3, k4 = jax.random.split(key, 4)
    # PyTorch nn.Linear default init: U(-1/sqrt(fan_in), 1/sqrt(fan_in))
    lim1 = 1.0 / jnp.sqrt(ID_CODE_DIM)
    lim2 = 1.0 / jnp.sqrt(HIDDEN)
    w1 = jax.random.uniform(k1, (ID_CODE_DIM, HIDDEN), jnp.float32, -lim1, lim1)
    b1 = jax.random.uniform(k2, (HIDDEN,), jnp.float32, -lim1, lim1)
    w2 = jax.random.uniform(k3, (HIDDEN, OUT_DIM), jnp.float32, -lim2, lim2)
    b2 = jax.random.uniform(k4, (OUT_DIM,), jnp.float32, -lim2, lim2)
    return w1, b1, w2, b2


def _reference(id_codes, w1, b1, w2, b2):
    h = jnp.maximum(id_codes @ w1 + b1[None, :], 0.0)
    return (h @ w2 + b2[None, :]).reshape(-1, JOINT_NUM, 3)


if __name__ == "__main__":
    key = jax.random.PRNGKey(0)
    k_params, k_in1, k_in2, k_in3 = jax.random.split(key, 4)
    w1, b1, w2, b2 = _init_params(k_params)
    slab = pack_params(w1, b1, w2, b2)

    # 1) Single id_code — module semantics: (JOINT_NUM, 3).
    id_code = jax.random.normal(k_in1, (ID_CODE_DIM,), jnp.float32)
    single = jax.block_until_ready(skeleton_refine_net(id_code, slab))
    ref_single = _reference(id_code.reshape(1, -1), w1, b1, w2, b2)[0]
    assert single.shape == (JOINT_NUM, 3)
    assert jnp.allclose(single, ref_single, atol=1e-4, rtol=1e-4)

    # 2) Small batch — grid-less path, everything resident in VMEM.
    xb = jax.random.normal(k_in2, (16, ID_CODE_DIM), jnp.float32)
    out_b = jax.block_until_ready(skeleton_refine_net_batched(xb, slab))
    assert out_b.shape == (16, JOINT_NUM, 3)
    assert jnp.allclose(out_b, _reference(xb, w1, b1, w2, b2), atol=1e-4, rtol=1e-4)

    # 3) Larger batch — gridded path, 'parallel' batch axis (v7x megacore).
    xl = jax.random.normal(k_in3, (300, ID_CODE_DIM), jnp.float32)
    out_l = jax.block_until_ready(skeleton_refine_net_batched(xl, slab))
    assert out_l.shape == (300, JOINT_NUM, 3)
    assert jnp.allclose(out_l, _reference(xl, w1, b1, w2, b2), atol=1e-4, rtol=1e-4)

    print("KERNEL_OK")
</pallas_src>

<mosaic_0001>
module attributes {stable_mosaic.version = 11 : i64} {
  func.func @_skeleton_refine_kernel(%arg0: memref<8x32xf32, #tpu.memory_space<vmem>>, %arg1: memref<176x128xf32, #tpu.memory_space<vmem>>, %arg2: memref<8x128xf32, #tpu.memory_space<vmem>>) attributes {dimension_semantics = [], scalar_prefetch = 0 : i64, scratch_operands = 0 : i64, tpu.core_type = #tpu.core_type<tc>} {
    %c0 = arith.constant 0 : index
    %c0_0 = arith.constant 0 : index
    %0 = vector.load %arg0[%c0, %c0_0] : memref<8x32xf32, #tpu.memory_space<vmem>>, vector<8x32xf32>
    %c0_1 = arith.constant 0 : index
    %c0_2 = arith.constant 0 : index
    %1 = vector.load %arg1[%c0_1, %c0_2] : memref<176x128xf32, #tpu.memory_space<vmem>>, vector<32x128xf32>
    %c32 = arith.constant 32 : index
    %c0_3 = arith.constant 0 : index
    %2 = vector.load %arg1[%c32, %c0_3] : memref<176x128xf32, #tpu.memory_space<vmem>>, vector<1x128xf32>
    %c40 = arith.constant 40 : index
    %c0_4 = arith.constant 0 : index
    %3 = vector.load %arg1[%c40, %c0_4] : memref<176x128xf32, #tpu.memory_space<vmem>>, vector<128x128xf32>
    %c168 = arith.constant 168 : index
    %c0_5 = arith.constant 0 : index
    %4 = vector.load %arg1[%c168, %c0_5] : memref<176x128xf32, #tpu.memory_space<vmem>>, vector<1x128xf32>
    %cst = arith.constant dense<0.000000e+00> : vector<8x128xf32>
    %5 = tpu.matmul %0, %1, %cst {dimension_numbers = #tpu.dot_dimension_numbers<[1], [0], [0], [1], [0, 0, 1, 1], [], []>} : vector<8x32xf32>, vector<32x128xf32>, vector<8x128xf32> -> vector<8x128xf32>
    %6 = vector.broadcast %2 : vector<1x128xf32> to vector<8x128xf32>
    %7 = arith.addf %5, %6 : vector<8x128xf32>
    %cst_6 = arith.constant 0.000000e+00 : f32
    %8 = vector.broadcast %cst_6 : f32 to vector<8x128xf32>
    %9 = arith.maximumf %7, %8 : vector<8x128xf32>
    %cst_7 = arith.constant dense<0.000000e+00> : vector<8x128xf32>
    %10 = tpu.matmul %9, %3, %cst_7 {dimension_numbers = #tpu.dot_dimension_numbers<[1], [0], [0], [1], [0, 0, 1, 1], [], []>} : vector<8x128xf32>, vector<128x128xf32>, vector<8x128xf32> -> vector<8x128xf32>
    %11 = vector.broadcast %4 : vector<1x128xf32> to vector<8x128xf32>
    %12 = arith.addf %10, %11 : vector<8x128xf32>
    %c0_8 = arith.constant 0 : index
    %c0_9 = arith.constant 0 : index
    %13 = vector.load %arg2[%c0_8, %c0_9] : memref<8x128xf32, #tpu.memory_space<vmem>>, vector<8x128xf32>
    tpu.vector_store %arg2[%c0_8, %c0_9], %12 {strides = array<i32>} : memref<8x128xf32, #tpu.memory_space<vmem>>, vector<8x128xf32>,
    return
  }
}

</mosaic_0001>

<llo_original>
// kernel: tpu_custom_call.1
$region0: #{tpu_custom_call.1}
  #allocation0 [shape = 'u32[]', space=smem, size = 0x4, offset = 0x4, fixed_abs, tag = 'smem constant byte address 0x4 - core index']
  #allocation1 [shape = 'u32[72,128]{1,0:T(1,128)}', space=vmem, size = 0x9000, scoped, tag = 'internal scratch']
  %s0 = inlined_call_operand.hbm [shape: f32[8,32], index: 0, kind: input, shape index: {}]
  %s1 = inlined_call_operand.hbm [shape: f32[176,128], index: 1, kind: input, shape index: {}]
  %s2 = inlined_call_operand.hbm [shape: f32[8,128], index: 2, kind: output, shape index: {}]
  %s3 = sld [smem:[#allocation0]]
  $region26: #{tpu_custom_call.1} parent=0
    _
  %s5 = ssub.s32 1, %s3
  %s6 = scalar_select 0, %s5, %s3
  $region1: #{tpu_custom_call.1} parent=0
    #allocation2 [shape = 'u8[4096]{0}', space=vmem, size = 0x1000, scoped, tag = 'input window, operand 0, single buffered']
    #allocation3 [shape = 's32[1]{0}', space=sflag, size = 0x4, scoped, tag = 'scoped memory for tpu_custom_call.1']
    #allocation4 [shape = 's32[1]{0}', space=sflag, size = 0x4, scoped, tag = 'scoped memory for tpu_custom_call.1']
    #allocation5 [shape = 'u8[90112]{0}', space=vmem, size = 0x16000, scoped, tag = 'input window, operand 1, single buffered']
    #allocation6 [shape = 's32[1]{0}', space=sflag, size = 0x4, scoped, tag = 'scoped memory for tpu_custom_call.1']
    #allocation7 [shape = 'u8[4096]{0}', space=vmem, size = 0x1000, scoped, tag = 'output window, operand 0, single buffered']
    %7 = vsyncpa [#allocation3], 0
    %8 = vsyncpa [#allocation6], 0
    %9 = vsyncpa [#allocation4], 0
    // Predicated region
    $region2: #{tpu_custom_call.1} parent=1 // pred_check
      _
    $region3: #{tpu_custom_call.1} parent=1 // pred_check_branch
      %11 = sbr.rel (0) target = $region5
    $region4: #{tpu_custom_call.1} parent=1 // pred_region
      %13 = vsyncadd [#allocation3], 0
      %s15 = sshll.u32 %s0, 4
      %s16 = int_to_ptr.hbm [resolvable:$true] %s15
      %s17 = sshll.u32 [#allocation2], 4
      %s18 = int_to_ptr.vmem [resolvable:$true] %s17
      %20 = dma.hbm_to_vmem [thread:$0]  %s16, 128, %s18, [#allocation3]
    $region5: #{tpu_custom_call.1} parent=1 // pred_fallthru
      _
    // Predicated region
    $region6: #{tpu_custom_call.1} parent=1 // pred_check
      _
    $region7: #{tpu_custom_call.1} parent=1 // pred_check_branch
      %22 = sbr.rel (0) target = $region9
    $region8: #{tpu_custom_call.1} parent=1 // pred_region
      %24 = vsyncadd [#allocation6], 0
      %s25 = sshll.u32 %s1, 4
      %s26 = int_to_ptr.hbm [resolvable:$true] %s25
      %s27 = sshll.u32 [#allocation5], 4
      %s28 = int_to_ptr.vmem [resolvable:$true] %s27
      %33 = dma.hbm_to_vmem [thread:$0]  %s26, 2816, %s28, [#allocation6], 128, 128, 8
    $region9: #{tpu_custom_call.1} parent=1 // pred_fallthru
      _
    // Predicated region
    $region10: #{tpu_custom_call.1} parent=1 // pred_check
      _
    $region11: #{tpu_custom_call.1} parent=1 // pred_check_branch
      %35 = sbr.rel (0) target = $region13
    $region12: #{tpu_custom_call.1} parent=1 // pred_region
      %37 = dma.done [#allocation3], 128
    $region13: #{tpu_custom_call.1} parent=1 // pred_fallthru
      _
    // Predicated region
    $region14: #{tpu_custom_call.1} parent=1 // pred_check
      _
    $region15: #{tpu_custom_call.1} parent=1 // pred_check_branch
      %39 = sbr.rel (0) target = $region17
    $region16: #{tpu_custom_call.1} parent=1 // pred_region
      %41 = dma.done [#allocation6], 2816
    $region17: #{tpu_custom_call.1} parent=1 // pred_fallthru
      _
    %v42 = vld [vmem:[#allocation2] sm:$0xff]
    %v43 = vld [vmem:[#allocation5] sm:$0xff]
    %v44 = vld [vmem:[#allocation5 + $0x8] sm:$0xff]
    %v45 = vld [vmem:[#allocation5 + $0x10] sm:$0xff]
    %v46 = vld [vmem:[#allocation5 + $0x18] sm:$0xff]
    %v47 = vld [vmem:[#allocation5 + $0x20] sm:$0x1]
    %v48 = vld [vmem:[#allocation5 + $0x28] sm:$0xff]
    %v49 = vld [vmem:[#allocation5 + $0x30] sm:$0xff]
    %v50 = vld [vmem:[#allocation5 + $0x38] sm:$0xff]
    %v51 = vld [vmem:[#allocation5 + $0x40] sm:$0xff]
    %v52 = vld [vmem:[#allocation5 + $0x48] sm:$0xff]
    %v53 = vld [vmem:[#allocation5 + $0x50] sm:$0xff]
    %v54 = vld [vmem:[#allocation5 + $0x58] sm:$0xff]
    %v55 = vld [vmem:[#allocation5 + $0x60] sm:$0xff]
    %v56 = vld [vmem:[#allocation5 + $0x68] sm:$0xff]
    %v57 = vld [vmem:[#allocation5 + $0x70] sm:$0xff]
    %v58 = vld [vmem:[#allocation5 + $0x78] sm:$0xff]
    %v59 = vld [vmem:[#allocation5 + $0x80] sm:$0xff]
    %v60 = vld [vmem:[#allocation5 + $0x88] sm:$0xff]
    %v61 = vld [vmem:[#allocation5 + $0x90] sm:$0xff]
    %v62 = vld [vmem:[#allocation5 + $0x98] sm:$0xff]
    %v63 = vld [vmem:[#allocation5 + $0xa0] sm:$0xff]
    %v64 = vld [vmem:[#allocation5 + $0xa8] sm:$0x1]
    %v65 = vperm.slane %v47, 0
    %vm66 = vcmask 261120
    %v68 = vsel %vm66, %v42, 0
    %70 = vmatpush.msra.mxu0 0.0
    %71 = vmatpush.msra.mxu0 0.0
    %72 = vmatpush.msra.mxu0 0.0
    %73 = vmatpush.msra.mxu0 0.0
    %74 = vmatpush.msra.mxu0 0.0
    %75 = vmatpush.msra.mxu0 0.0
    %76 = vmatpush.msra.mxu0 0.0
    %77 = vmatpush.msra.mxu0 0.0
    %78 = vmatpush.msra.mxu0 0.0
    %79 = vmatpush.msra.mxu0 0.0
    %80 = vmatpush.msra.mxu0 0.0
    %81 = vmatpush.msra.mxu0 0.0
    %82 = vmatpush.msra.mxu0 %v46
    %83 = vmatpush.msra.mxu0 %v45
    %84 = vmatpush.msra.mxu0 %v44
    %85 = vmatpush.msra.mxu0 %v43
    %86 = vmatmul.f32.gmra.mxu0 %v68
    %v87 = vpop.f32.mrf.mxu0
    %v88 = vadd.f32 %v65, %v87
    %89 = vdwg.mxu0
    %v90 = vmax.f32 %v88, 0.0
    %v91 = vperm.slane %v64, 0
    %92 = vmatpush.msra.mxu0 %v63
    %93 = vmatpush.msra.mxu0 %v62
    %94 = vmatpush.msra.mxu0 %v61
    %95 = vmatpush.msra.mxu0 %v60
    %96 = vmatpush.msra.mxu0 %v59
    %97 = vmatpush.msra.mxu0 %v58
    %98 = vmatpush.msra.mxu0 %v57
    %99 = vmatpush.msra.mxu0 %v56
    %100 = vmatpush.msra.mxu0 %v55
    %101 = vmatpush.msra.mxu0 %v54
    %102 = vmatpush.msra.mxu0 %v53
    %103 = vmatpush.msra.mxu0 %v52
    %104 = vmatpush.msra.mxu0 %v51
    %105 = vmatpush.msra.mxu0 %v50
    %106 = vmatpush.msra.mxu0 %v49
    %107 = vmatpush.msra.mxu0 %v48
    %108 = vmatmul.f32.gmra.mxu0 %v90
    %v109 = vpop.f32.mrf.mxu0
    %v110 = vadd.f32 %v91, %v109
    %111 = vdwg.mxu0
    %112 = vst [vmem:[#allocation7] sm:$0xff] %v110
    // Predicated region
    $region18: #{tpu_custom_call.1} parent=1 // pred_check
      _
    $region19: #{tpu_custom_call.1} parent=1 // pred_check_branch
      %114 = sbr.rel (0) target = $region21
    $region20: #{tpu_custom_call.1} parent=1 // pred_region
      %116 = vsyncadd [#allocation4], 0
      %s118 = sshll.u32 [#allocation7], 4
      %s119 = int_to_ptr.vmem [resolvable:$true] %s118
      %s120 = sshll.u32 %s2, 4
      %s121 = int_to_ptr.hbm [resolvable:$true] %s120
      %123 = dma.vmem_to_hbm [thread:$0]  %s119, 128, %s121, [#allocation4]
    $region21: #{tpu_custom_call.1} parent=1 // pred_fallthru
      _
    // Predicated region
    $region22: #{tpu_custom_call.1} parent=1 // pred_check
      _
    $region23: #{tpu_custom_call.1} parent=1 // pred_check_branch
      %125 = sbr.rel (0) target = $region25
    $region24: #{tpu_custom_call.1} parent=1 // pred_region
      %127 = dma.done [#allocation4], 128
    $region25: #{tpu_custom_call.1} parent=1 // pred_fallthru
      _
    %128 = vsyncpa [#allocation3], 1
    %129 = vsyncpa [#allocation6], 1
    %130 = vsyncpa [#allocation4], 1

</llo_original>
